<compile_context>
chip_gen: v7x
topology: tpu7x:2x2x1
jax: 0.10.0
libtpu: 0.0.40
codegen_flags: <defaults>
</compile_context>

<pallas_src>
import math

import jax
import jax.numpy as jnp
from jax.experimental import pallas as pl
from jax.experimental.pallas import tpu as pltpu

# --------------------------- model / test config ----------------------------
B = 2          # batch
L = 8          # sequence length
E = 8          # d_in == embed_dim == d_out_kq == d_out_v (mlh(x,x,x) needs kdim==vdim==d_in)
NH = 2         # num_heads
HD = E // NH   # head dim
SCALE = 1.0 / math.sqrt(HD)


# --------------------------------- kernel -----------------------------------
def mhsa_kernel(x_ref, wqkv_ref, bqkv_ref, bias_kv_ref, wo_ref, bo_ref, o_ref):
    # Whole batch in one grid step; flatten to (B*L, E) so projections are
    # shared across the batch (zero-cost reshape: minor dim unchanged).
    x2d = x_ref[...].reshape(B * L, E)

    # Fused Q/K/V projection: one MXU push instead of three per batch element.
    qkv = jnp.dot(x2d, wqkv_ref[...], preferred_element_type=jnp.float32)
    qkv = qkv + bqkv_ref[...]                                # (B*L, 3E)

    bias_kv = bias_kv_ref[...]                               # (2, E): row0=bias_k, row1=bias_v

    batch_ctx = []
    for b in range(B):                 # B and NH are tiny & static -> unrolled
        r0 = b * L
        head_ctx = []
        for h in range(NH):
            c = h * HD
            qh = qkv[r0:r0 + L, c:c + HD] * SCALE            # (L, HD)
            kh = qkv[r0:r0 + L, E + c:E + c + HD]            # (L, HD)
            vh = qkv[r0:r0 + L, 2 * E + c:2 * E + c + HD]    # (L, HD)
            bk = bias_kv[0:1, c:c + HD]                      # (1, HD)
            bv = bias_kv[1:2, c:c + HD]                      # (1, HD)

            # Scores against the L real keys (q @ k.T, no explicit transpose) ...
            s = jax.lax.dot_general(qh, kh, (((1,), (1,)), ((), ())),
                                    preferred_element_type=jnp.float32)  # (L, L)
            # ... and against the single learned bias_k token: handled as an
            # extra softmax column analytically (no 9-row sublane concat).
            sb = jnp.sum(qh * bk, axis=-1, keepdims=True)                # (L, 1)

            m = jnp.maximum(jnp.max(s, axis=-1, keepdims=True), sb)
            p = jnp.exp(s - m)                                           # (L, L)
            pb = jnp.exp(sb - m)                                         # (L, 1)
            denom = jnp.sum(p, axis=-1, keepdims=True) + pb              # (L, 1)

            ctx = jnp.dot(p, vh, preferred_element_type=jnp.float32)     # (L, HD)
            ctx = (ctx + pb * bv) / denom
            head_ctx.append(ctx)
        batch_ctx.append(jnp.concatenate(head_ctx, axis=-1))             # (L, E)

    ctx_all = jnp.concatenate(batch_ctx, axis=0)                         # (B*L, E)

    # Output projection shared across the batch.
    out = jnp.dot(ctx_all, wo_ref[...], preferred_element_type=jnp.float32)
    out = out + bo_ref[...]
    o_ref[...] = out.reshape(B, L, E).astype(o_ref.dtype)


# -------------------------------- wrapper ------------------------------------
def mhsa_pallas(x, wqkv, bqkv, bias_kv, wo, bo):
    b, l, e = x.shape
    return pl.pallas_call(
        mhsa_kernel,
        out_shape=jax.ShapeDtypeStruct((b, l, e), jnp.float32),
        grid=(1,),
        in_specs=[
            pl.BlockSpec((b, l, e), lambda i: (0, 0, 0)),
            pl.BlockSpec(wqkv.shape, lambda i: (0, 0)),
            pl.BlockSpec(bqkv.shape, lambda i: (0, 0)),
            pl.BlockSpec(bias_kv.shape, lambda i: (0, 0)),
            pl.BlockSpec(wo.shape, lambda i: (0, 0)),
            pl.BlockSpec(bo.shape, lambda i: (0, 0)),
        ],
        out_specs=pl.BlockSpec((b, l, e), lambda i: (0, 0, 0)),
        compiler_params=pltpu.CompilerParams(
            dimension_semantics=("arbitrary",)),
    )(x, wqkv, bqkv, bias_kv, wo, bo)


# --------------------------- pure-JAX reference -------------------------------
def mhsa_ref(x, wqkv, bqkv, bias_kv, wo, bo):
    bsz = x.shape[0]
    qkv = jnp.einsum('ble,ef->blf', x, wqkv) + bqkv          # (B, L, 3E)
    q, k, v = qkv[..., :E], qkv[..., E:2 * E], qkv[..., 2 * E:]
    bias_k = jnp.broadcast_to(bias_kv[0][None, None, :], (bsz, 1, E))
    bias_v = jnp.broadcast_to(bias_kv[1][None, None, :], (bsz, 1, E))
    k = jnp.concatenate([k, bias_k], axis=1)                 # (B, L+1, E)
    v = jnp.concatenate([v, bias_v], axis=1)                 # (B, L+1, E)
    heads = []
    for h in range(NH):
        c = h * HD
        qh = q[..., c:c + HD] * SCALE
        kh = k[..., c:c + HD]
        vh = v[..., c:c + HD]
        s = jnp.einsum('bqd,bkd->bqk', qh, kh)
        a = jax.nn.softmax(s, axis=-1)
        heads.append(jnp.einsum('bqk,bkd->bqd', a, vh))
    ctx = jnp.concatenate(heads, axis=-1)                    # (B, L, E)
    return jnp.einsum('ble,ef->blf', ctx, wo) + bo


# ----------------------------------- main -------------------------------------
if __name__ == "__main__":
    key = jax.random.PRNGKey(0)
    kx, kw, kb, kkv, kwo, kbo = jax.random.split(key, 6)

    x = jax.random.normal(kx, (B, L, E), dtype=jnp.float32)
    # packed [Wq | Wk | Wv] (in_dim, 3E) and its fused bias (1, 3E)
    wqkv = (0.1 * jax.random.normal(kw, (E, 3 * E))).astype(jnp.float32)
    bqkv = (0.1 * jax.random.normal(kb, (1, 3 * E))).astype(jnp.float32)
    # row 0 = bias_k, row 1 = bias_v (the add_bias_kv learned tokens)
    bias_kv = (0.1 * jax.random.normal(kkv, (2, E))).astype(jnp.float32)
    wo = (0.1 * jax.random.normal(kwo, (E, E))).astype(jnp.float32)
    bo = (0.1 * jax.random.normal(kbo, (1, E))).astype(jnp.float32)

    out = mhsa_pallas(x, wqkv, bqkv, bias_kv, wo, bo)
    jax.block_until_ready(out)

    ref = mhsa_ref(x, wqkv, bqkv, bias_kv, wo, bo)

    assert out.shape == (B, L, E), out.shape
    max_err = float(jnp.max(jnp.abs(out - ref)))
    assert jnp.allclose(out, ref, atol=5e-3, rtol=5e-3), max_err

    print("KERNEL_OK")
</pallas_src>

<mosaic_0001>
module attributes {stable_mosaic.version = 11 : i64} {
  func.func @mhsa_kernel(%arg0: i32, %arg1: memref<2x8x8xf32, #tpu.memory_space<vmem>>, %arg2: memref<8x24xf32, #tpu.memory_space<vmem>>, %arg3: memref<1x24xf32, #tpu.memory_space<vmem>>, %arg4: memref<2x8xf32, #tpu.memory_space<vmem>>, %arg5: memref<8x8xf32, #tpu.memory_space<vmem>>, %arg6: memref<1x8xf32, #tpu.memory_space<vmem>>, %arg7: memref<2x8x8xf32, #tpu.memory_space<vmem>>) attributes {dimension_semantics = [#tpu.dimension_semantics<arbitrary>], iteration_bounds = array<i64: 1>, scalar_prefetch = 0 : i64, scratch_operands = 0 : i64, tpu.core_type = #tpu.core_type<tc>, window_params = [{pipeline_mode = #tpu.pipeline_mode<synchronous>, transform_indices = @transform_0, window_bounds = array<i64: 2, 8, 8>}, {pipeline_mode = #tpu.pipeline_mode<synchronous>, transform_indices = @transform_1, window_bounds = array<i64: 8, 24>}, {pipeline_mode = #tpu.pipeline_mode<synchronous>, transform_indices = @transform_2, window_bounds = array<i64: 1, 24>}, {pipeline_mode = #tpu.pipeline_mode<synchronous>, transform_indices = @transform_3, window_bounds = array<i64: 2, 8>}, {pipeline_mode = #tpu.pipeline_mode<synchronous>, transform_indices = @transform_4, window_bounds = array<i64: 8, 8>}, {pipeline_mode = #tpu.pipeline_mode<synchronous>, transform_indices = @transform_5, window_bounds = array<i64: 1, 8>}, {pipeline_mode = #tpu.pipeline_mode<synchronous>, transform_indices = @transform_6, window_bounds = array<i64: 2, 8, 8>}]} {
    %c0 = arith.constant 0 : index
    %c0_0 = arith.constant 0 : index
    %c0_1 = arith.constant 0 : index
    %0 = vector.load %arg1[%c0, %c0_0, %c0_1] : memref<2x8x8xf32, #tpu.memory_space<vmem>>, vector<2x8x8xf32>
    %1 = vector.shape_cast %0 : vector<2x8x8xf32> to vector<16x8xf32>
    %c0_2 = arith.constant 0 : index
    %c0_3 = arith.constant 0 : index
    %2 = vector.load %arg2[%c0_2, %c0_3] : memref<8x24xf32, #tpu.memory_space<vmem>>, vector<8x24xf32>
    %cst = arith.constant dense<0.000000e+00> : vector<16x24xf32>
    %3 = tpu.matmul %1, %2, %cst {dimension_numbers = #tpu.dot_dimension_numbers<[1], [0], [0], [1], [0, 0, 1, 1], [], []>} : vector<16x8xf32>, vector<8x24xf32>, vector<16x24xf32> -> vector<16x24xf32>
    %c0_4 = arith.constant 0 : index
    %c0_5 = arith.constant 0 : index
    %4 = vector.load %arg3[%c0_4, %c0_5] : memref<1x24xf32, #tpu.memory_space<vmem>>, vector<1x24xf32>
    %5 = vector.broadcast %4 : vector<1x24xf32> to vector<16x24xf32>
    %6 = arith.addf %3, %5 : vector<16x24xf32>
    %c0_6 = arith.constant 0 : index
    %c0_7 = arith.constant 0 : index
    %7 = vector.load %arg4[%c0_6, %c0_7] : memref<2x8xf32, #tpu.memory_space<vmem>>, vector<2x8xf32>
    %8 = vector.extract_strided_slice %6 {offsets = [0, 0], sizes = [8, 4], strides = [1, 1]} : vector<16x24xf32> to vector<8x4xf32>
    %cst_8 = arith.constant 5.000000e-01 : f32
    %9 = vector.broadcast %cst_8 : f32 to vector<8x4xf32>
    %10 = arith.mulf %8, %9 : vector<8x4xf32>
    %11 = vector.extract_strided_slice %6 {offsets = [0, 8], sizes = [8, 4], strides = [1, 1]} : vector<16x24xf32> to vector<8x4xf32>
    %12 = vector.extract_strided_slice %6 {offsets = [0, 16], sizes = [8, 4], strides = [1, 1]} : vector<16x24xf32> to vector<8x4xf32>
    %13 = vector.extract_strided_slice %7 {offsets = [0, 0], sizes = [1, 4], strides = [1, 1]} : vector<2x8xf32> to vector<1x4xf32>
    %14 = vector.extract_strided_slice %7 {offsets = [1, 0], sizes = [1, 4], strides = [1, 1]} : vector<2x8xf32> to vector<1x4xf32>
    %cst_9 = arith.constant dense<0.000000e+00> : vector<8x8xf32>
    %15 = tpu.matmul %10, %11, %cst_9 {dimension_numbers = #tpu.dot_dimension_numbers<[1], [1], [0], [0], [0, 0, 1, 0], [], []>} : vector<8x4xf32>, vector<8x4xf32>, vector<8x8xf32> -> vector<8x8xf32>
    %16 = vector.broadcast %13 : vector<1x4xf32> to vector<8x4xf32>
    %17 = arith.mulf %10, %16 : vector<8x4xf32>
    %cst_10 = arith.constant dense<0.000000e+00> : vector<8xf32>
    %18 = vector.multi_reduction <add>, %17, %cst_10 [1] : vector<8x4xf32> to vector<8xf32>
    %19 = vector.shape_cast %18 : vector<8xf32> to vector<8x1xf32>
    %cst_11 = arith.constant dense<0xFF800000> : vector<8xf32>
    %20 = vector.multi_reduction <maximumf>, %15, %cst_11 [1] : vector<8x8xf32> to vector<8xf32>
    %21 = vector.shape_cast %20 : vector<8xf32> to vector<8x1xf32>
    %22 = arith.maximumf %21, %19 : vector<8x1xf32>
    %23 = vector.broadcast %22 : vector<8x1xf32> to vector<8x8xf32>
    %24 = arith.subf %15, %23 : vector<8x8xf32>
    %25 = math.exp %24 : vector<8x8xf32>
    %26 = arith.subf %19, %22 : vector<8x1xf32>
    %27 = math.exp %26 : vector<8x1xf32>
    %cst_12 = arith.constant dense<0.000000e+00> : vector<8xf32>
    %28 = vector.multi_reduction <add>, %25, %cst_12 [1] : vector<8x8xf32> to vector<8xf32>
    %29 = vector.shape_cast %28 : vector<8xf32> to vector<8x1xf32>
    %30 = arith.addf %29, %27 : vector<8x1xf32>
    %cst_13 = arith.constant dense<0.000000e+00> : vector<8x4xf32>
    %31 = tpu.matmul %25, %12, %cst_13 {dimension_numbers = #tpu.dot_dimension_numbers<[1], [0], [0], [1], [0, 0, 1, 1], [], []>} : vector<8x8xf32>, vector<8x4xf32>, vector<8x4xf32> -> vector<8x4xf32>
    %32 = vector.broadcast %27 : vector<8x1xf32> to vector<8x4xf32>
    %33 = vector.broadcast %14 : vector<1x4xf32> to vector<8x4xf32>
    %34 = arith.mulf %32, %33 : vector<8x4xf32>
    %35 = arith.addf %31, %34 : vector<8x4xf32>
    %36 = vector.broadcast %30 : vector<8x1xf32> to vector<8x4xf32>
    %37 = arith.divf %35, %36 : vector<8x4xf32>
    %38 = vector.extract_strided_slice %6 {offsets = [0, 4], sizes = [8, 4], strides = [1, 1]} : vector<16x24xf32> to vector<8x4xf32>
    %cst_14 = arith.constant 5.000000e-01 : f32
    %39 = vector.broadcast %cst_14 : f32 to vector<8x4xf32>
    %40 = arith.mulf %38, %39 : vector<8x4xf32>
    %41 = vector.extract_strided_slice %6 {offsets = [0, 12], sizes = [8, 4], strides = [1, 1]} : vector<16x24xf32> to vector<8x4xf32>
    %42 = vector.extract_strided_slice %6 {offsets = [0, 20], sizes = [8, 4], strides = [1, 1]} : vector<16x24xf32> to vector<8x4xf32>
    %43 = vector.extract_strided_slice %7 {offsets = [0, 4], sizes = [1, 4], strides = [1, 1]} : vector<2x8xf32> to vector<1x4xf32>
    %44 = vector.extract_strided_slice %7 {offsets = [1, 4], sizes = [1, 4], strides = [1, 1]} : vector<2x8xf32> to vector<1x4xf32>
    %cst_15 = arith.constant dense<0.000000e+00> : vector<8x8xf32>
    %45 = tpu.matmul %40, %41, %cst_15 {dimension_numbers = #tpu.dot_dimension_numbers<[1], [1], [0], [0], [0, 0, 1, 0], [], []>} : vector<8x4xf32>, vector<8x4xf32>, vector<8x8xf32> -> vector<8x8xf32>
    %46 = vector.broadcast %43 : vector<1x4xf32> to vector<8x4xf32>
    %47 = arith.mulf %40, %46 : vector<8x4xf32>
    %cst_16 = arith.constant dense<0.000000e+00> : vector<8xf32>
    %48 = vector.multi_reduction <add>, %47, %cst_16 [1] : vector<8x4xf32> to vector<8xf32>
    %49 = vector.shape_cast %48 : vector<8xf32> to vector<8x1xf32>
    %cst_17 = arith.constant dense<0xFF800000> : vector<8xf32>
    %50 = vector.multi_reduction <maximumf>, %45, %cst_17 [1] : vector<8x8xf32> to vector<8xf32>
    %51 = vector.shape_cast %50 : vector<8xf32> to vector<8x1xf32>
    %52 = arith.maximumf %51, %49 : vector<8x1xf32>
    %53 = vector.broadcast %52 : vector<8x1xf32> to vector<8x8xf32>
    %54 = arith.subf %45, %53 : vector<8x8xf32>
    %55 = math.exp %54 : vector<8x8xf32>
    %56 = arith.subf %49, %52 : vector<8x1xf32>
    %57 = math.exp %56 : vector<8x1xf32>
    %cst_18 = arith.constant dense<0.000000e+00> : vector<8xf32>
    %58 = vector.multi_reduction <add>, %55, %cst_18 [1] : vector<8x8xf32> to vector<8xf32>
    %59 = vector.shape_cast %58 : vector<8xf32> to vector<8x1xf32>
    %60 = arith.addf %59, %57 : vector<8x1xf32>
    %cst_19 = arith.constant dense<0.000000e+00> : vector<8x4xf32>
    %61 = tpu.matmul %55, %42, %cst_19 {dimension_numbers = #tpu.dot_dimension_numbers<[1], [0], [0], [1], [0, 0, 1, 1], [], []>} : vector<8x8xf32>, vector<8x4xf32>, vector<8x4xf32> -> vector<8x4xf32>
    %62 = vector.broadcast %57 : vector<8x1xf32> to vector<8x4xf32>
    %63 = vector.broadcast %44 : vector<1x4xf32> to vector<8x4xf32>
    %64 = arith.mulf %62, %63 : vector<8x4xf32>
    %65 = arith.addf %61, %64 : vector<8x4xf32>
    %66 = vector.broadcast %60 : vector<8x1xf32> to vector<8x4xf32>
    %67 = arith.divf %65, %66 : vector<8x4xf32>
    %68 = tpu.concatenate %37, %67 in 1 : vector<8x4xf32>, vector<8x4xf32> -> vector<8x8xf32>
    %69 = vector.extract_strided_slice %6 {offsets = [8, 0], sizes = [8, 4], strides = [1, 1]} : vector<16x24xf32> to vector<8x4xf32>
    %cst_20 = arith.constant 5.000000e-01 : f32
    %70 = vector.broadcast %cst_20 : f32 to vector<8x4xf32>
    %71 = arith.mulf %69, %70 : vector<8x4xf32>
    %72 = vector.extract_strided_slice %6 {offsets = [8, 8], sizes = [8, 4], strides = [1, 1]} : vector<16x24xf32> to vector<8x4xf32>
    %73 = vector.extract_strided_slice %6 {offsets = [8, 16], sizes = [8, 4], strides = [1, 1]} : vector<16x24xf32> to vector<8x4xf32>
    %74 = vector.extract_strided_slice %7 {offsets = [0, 0], sizes = [1, 4], strides = [1, 1]} : vector<2x8xf32> to vector<1x4xf32>
    %75 = vector.extract_strided_slice %7 {offsets = [1, 0], sizes = [1, 4], strides = [1, 1]} : vector<2x8xf32> to vector<1x4xf32>
    %cst_21 = arith.constant dense<0.000000e+00> : vector<8x8xf32>
    %76 = tpu.matmul %71, %72, %cst_21 {dimension_numbers = #tpu.dot_dimension_numbers<[1], [1], [0], [0], [0, 0, 1, 0], [], []>} : vector<8x4xf32>, vector<8x4xf32>, vector<8x8xf32> -> vector<8x8xf32>
    %77 = vector.broadcast %74 : vector<1x4xf32> to vector<8x4xf32>
    %78 = arith.mulf %71, %77 : vector<8x4xf32>
    %cst_22 = arith.constant dense<0.000000e+00> : vector<8xf32>
    %79 = vector.multi_reduction <add>, %78, %cst_22 [1] : vector<8x4xf32> to vector<8xf32>
    %80 = vector.shape_cast %79 : vector<8xf32> to vector<8x1xf32>
    %cst_23 = arith.constant dense<0xFF800000> : vector<8xf32>
    %81 = vector.multi_reduction <maximumf>, %76, %cst_23 [1] : vector<8x8xf32> to vector<8xf32>
    %82 = vector.shape_cast %81 : vector<8xf32> to vector<8x1xf32>
    %83 = arith.maximumf %82, %80 : vector<8x1xf32>
    %84 = vector.broadcast %83 : vector<8x1xf32> to vector<8x8xf32>
    %85 = arith.subf %76, %84 : vector<8x8xf32>
    %86 = math.exp %85 : vector<8x8xf32>
    %87 = arith.subf %80, %83 : vector<8x1xf32>
    %88 = math.exp %87 : vector<8x1xf32>
    %cst_24 = arith.constant dense<0.000000e+00> : vector<8xf32>
    %89 = vector.multi_reduction <add>, %86, %cst_24 [1] : vector<8x8xf32> to vector<8xf32>
    %90 = vector.shape_cast %89 : vector<8xf32> to vector<8x1xf32>
    %91 = arith.addf %90, %88 : vector<8x1xf32>
    %cst_25 = arith.constant dense<0.000000e+00> : vector<8x4xf32>
    %92 = tpu.matmul %86, %73, %cst_25 {dimension_numbers = #tpu.dot_dimension_numbers<[1], [0], [0], [1], [0, 0, 1, 1], [], []>} : vector<8x8xf32>, vector<8x4xf32>, vector<8x4xf32> -> vector<8x4xf32>
    %93 = vector.broadcast %88 : vector<8x1xf32> to vector<8x4xf32>
    %94 = vector.broadcast %75 : vector<1x4xf32> to vector<8x4xf32>
    %95 = arith.mulf %93, %94 : vector<8x4xf32>
    %96 = arith.addf %92, %95 : vector<8x4xf32>
    %97 = vector.broadcast %91 : vector<8x1xf32> to vector<8x4xf32>
    %98 = arith.divf %96, %97 : vector<8x4xf32>
    %99 = vector.extract_strided_slice %6 {offsets = [8, 4], sizes = [8, 4], strides = [1, 1]} : vector<16x24xf32> to vector<8x4xf32>
    %cst_26 = arith.constant 5.000000e-01 : f32
    %100 = vector.broadcast %cst_26 : f32 to vector<8x4xf32>
    %101 = arith.mulf %99, %100 : vector<8x4xf32>
    %102 = vector.extract_strided_slice %6 {offsets = [8, 12], sizes = [8, 4], strides = [1, 1]} : vector<16x24xf32> to vector<8x4xf32>
    %103 = vector.extract_strided_slice %6 {offsets = [8, 20], sizes = [8, 4], strides = [1, 1]} : vector<16x24xf32> to vector<8x4xf32>
    %104 = vector.extract_strided_slice %7 {offsets = [0, 4], sizes = [1, 4], strides = [1, 1]} : vector<2x8xf32> to vector<1x4xf32>
    %105 = vector.extract_strided_slice %7 {offsets = [1, 4], sizes = [1, 4], strides = [1, 1]} : vector<2x8xf32> to vector<1x4xf32>
    %cst_27 = arith.constant dense<0.000000e+00> : vector<8x8xf32>
    %106 = tpu.matmul %101, %102, %cst_27 {dimension_numbers = #tpu.dot_dimension_numbers<[1], [1], [0], [0], [0, 0, 1, 0], [], []>} : vector<8x4xf32>, vector<8x4xf32>, vector<8x8xf32> -> vector<8x8xf32>
    %107 = vector.broadcast %104 : vector<1x4xf32> to vector<8x4xf32>
    %108 = arith.mulf %101, %107 : vector<8x4xf32>
    %cst_28 = arith.constant dense<0.000000e+00> : vector<8xf32>
    %109 = vector.multi_reduction <add>, %108, %cst_28 [1] : vector<8x4xf32> to vector<8xf32>
    %110 = vector.shape_cast %109 : vector<8xf32> to vector<8x1xf32>
    %cst_29 = arith.constant dense<0xFF800000> : vector<8xf32>
    %111 = vector.multi_reduction <maximumf>, %106, %cst_29 [1] : vector<8x8xf32> to vector<8xf32>
    %112 = vector.shape_cast %111 : vector<8xf32> to vector<8x1xf32>
    %113 = arith.maximumf %112, %110 : vector<8x1xf32>
    %114 = vector.broadcast %113 : vector<8x1xf32> to vector<8x8xf32>
    %115 = arith.subf %106, %114 : vector<8x8xf32>
    %116 = math.exp %115 : vector<8x8xf32>
    %117 = arith.subf %110, %113 : vector<8x1xf32>
    %118 = math.exp %117 : vector<8x1xf32>
    %cst_30 = arith.constant dense<0.000000e+00> : vector<8xf32>
    %119 = vector.multi_reduction <add>, %116, %cst_30 [1] : vector<8x8xf32> to vector<8xf32>
    %120 = vector.shape_cast %119 : vector<8xf32> to vector<8x1xf32>
    %121 = arith.addf %120, %118 : vector<8x1xf32>
    %cst_31 = arith.constant dense<0.000000e+00> : vector<8x4xf32>
    %122 = tpu.matmul %116, %103, %cst_31 {dimension_numbers = #tpu.dot_dimension_numbers<[1], [0], [0], [1], [0, 0, 1, 1], [], []>} : vector<8x8xf32>, vector<8x4xf32>, vector<8x4xf32> -> vector<8x4xf32>
    %123 = vector.broadcast %118 : vector<8x1xf32> to vector<8x4xf32>
    %124 = vector.broadcast %105 : vector<1x4xf32> to vector<8x4xf32>
    %125 = arith.mulf %123, %124 : vector<8x4xf32>
    %126 = arith.addf %122, %125 : vector<8x4xf32>
    %127 = vector.broadcast %121 : vector<8x1xf32> to vector<8x4xf32>
    %128 = arith.divf %126, %127 : vector<8x4xf32>
    %129 = tpu.concatenate %98, %128 in 1 : vector<8x4xf32>, vector<8x4xf32> -> vector<8x8xf32>
    %130 = tpu.concatenate %68, %129 in 0 : vector<8x8xf32>, vector<8x8xf32> -> vector<16x8xf32>
    %c0_32 = arith.constant 0 : index
    %c0_33 = arith.constant 0 : index
    %131 = vector.load %arg5[%c0_32, %c0_33] : memref<8x8xf32, #tpu.memory_space<vmem>>, vector<8x8xf32>
    %cst_34 = arith.constant dense<0.000000e+00> : vector<16x8xf32>
    %132 = tpu.matmul %130, %131, %cst_34 {dimension_numbers = #tpu.dot_dimension_numbers<[1], [0], [0], [1], [0, 0, 1, 1], [], []>} : vector<16x8xf32>, vector<8x8xf32>, vector<16x8xf32> -> vector<16x8xf32>
    %c0_35 = arith.constant 0 : index
    %c0_36 = arith.constant 0 : index
    %133 = vector.load %arg6[%c0_35, %c0_36] : memref<1x8xf32, #tpu.memory_space<vmem>>, vector<1x8xf32>
    %134 = vector.broadcast %133 : vector<1x8xf32> to vector<16x8xf32>
    %135 = arith.addf %132, %134 : vector<16x8xf32>
    %136 = vector.shape_cast %135 : vector<16x8xf32> to vector<2x8x8xf32>
    %c0_37 = arith.constant 0 : index
    %c0_38 = arith.constant 0 : index
    %c0_39 = arith.constant 0 : index
    %137 = vector.load %arg7[%c0_37, %c0_38, %c0_39] : memref<2x8x8xf32, #tpu.memory_space<vmem>>, vector<2x8x8xf32>
    tpu.vector_store %arg7[%c0_37, %c0_38, %c0_39], %136 {strides = array<i32>} : memref<2x8x8xf32, #tpu.memory_space<vmem>>, vector<2x8x8xf32>,
    return
  }
  func.func @transform_0(%arg0: i32) -> (i32, i32, i32) {
    %c0_i32 = arith.constant 0 : i32
    %c0_i32_0 = arith.constant 0 : i32
    %c0_i32_1 = arith.constant 0 : i32
    %c0_i32_2 = arith.constant 0 : i32
    return %c0_i32, %c0_i32_0, %c0_i32_1 : i32, i32, i32
  }
  func.func @transform_1(%arg0: i32) -> (i32, i32) {
    %c0_i32 = arith.constant 0 : i32
    %c0_i32_0 = arith.constant 0 : i32
    %c0_i32_1 = arith.constant 0 : i32
    return %c0_i32, %c0_i32_0 : i32, i32
  }
  func.func @transform_2(%arg0: i32) -> (i32, i32) {
    %c0_i32 = arith.constant 0 : i32
    %c0_i32_0 = arith.constant 0 : i32
    %c0_i32_1 = arith.constant 0 : i32
    return %c0_i32, %c0_i32_0 : i32, i32
  }
  func.func @transform_3(%arg0: i32) -> (i32, i32) {
    %c0_i32 = arith.constant 0 : i32
    %c0_i32_0 = arith.constant 0 : i32
    %c0_i32_1 = arith.constant 0 : i32
    return %c0_i32, %c0_i32_0 : i32, i32
  }
  func.func @transform_4(%arg0: i32) -> (i32, i32) {
    %c0_i32 = arith.constant 0 : i32
    %c0_i32_0 = arith.constant 0 : i32
    %c0_i32_1 = arith.constant 0 : i32
    return %c0_i32, %c0_i32_0 : i32, i32
  }
  func.func @transform_5(%arg0: i32) -> (i32, i32) {
    %c0_i32 = arith.constant 0 : i32
    %c0_i32_0 = arith.constant 0 : i32
    %c0_i32_1 = arith.constant 0 : i32
    return %c0_i32, %c0_i32_0 : i32, i32
  }
  func.func @transform_6(%arg0: i32) -> (i32, i32, i32) {
    %c0_i32 = arith.constant 0 : i32
    %c0_i32_0 = arith.constant 0 : i32
    %c0_i32_1 = arith.constant 0 : i32
    %c0_i32_2 = arith.constant 0 : i32
    return %c0_i32, %c0_i32_0, %c0_i32_1 : i32, i32, i32
  }
}

</mosaic_0001>

<llo_original>
// kernel: tpu_custom_call.1
$region0: #{tpu_custom_call.1}
  #allocation0 [shape = 'u32[]', space=smem, size = 0x4, offset = 0x4, fixed_abs, tag = 'smem constant byte address 0x4 - core index']
  #allocation1 [shape = 'u32[144,128]{1,0:T(1,128)}', space=vmem, size = 0x12000, scoped, tag = 'internal scratch']
  %s0 = inlined_call_operand.hbm [shape: f32[2,8,8], index: 0, kind: input, shape index: {}]
  %s1 = inlined_call_operand.hbm [shape: f32[8,24], index: 1, kind: input, shape index: {}]
  %s2 = inlined_call_operand.vmem [shape: f32[1,24], index: 2, kind: input, shape index: {}]
  %s3 = inlined_call_operand.vmem [shape: f32[2,8], index: 3, kind: input, shape index: {}]
  %s4 = inlined_call_operand.vmem [shape: f32[8,8], index: 4, kind: input, shape index: {}]
  %s5 = inlined_call_operand.vmem [shape: f32[1,8], index: 5, kind: input, shape index: {}]
  %s6 = inlined_call_operand.hbm [shape: f32[2,8,8], index: 6, kind: output, shape index: {}]
  %s7 = sld [smem:[#allocation0]]
  $region42: #{tpu_custom_call.1} parent=0
    _
  %s9 = ssub.s32 1, %s7
  %s10 = scalar_select 0, %s9, %s7
  $region1: #{tpu_custom_call.1} parent=0
    #allocation2 [shape = 'u8[8192]{0}', space=vmem, size = 0x2000, scoped, tag = 'input window, operand 0, single buffered']
    #allocation3 [shape = 's32[1]{0}', space=sflag, size = 0x4, scoped, tag = 'scoped memory for tpu_custom_call.1']
    #allocation4 [shape = 's32[1]{0}', space=sflag, size = 0x4, scoped, tag = 'scoped memory for tpu_custom_call.1']
    #allocation5 [shape = 'u8[4096]{0}', space=vmem, size = 0x1000, scoped, tag = 'input window, operand 1, single buffered']
    #allocation6 [shape = 's32[1]{0}', space=sflag, size = 0x4, scoped, tag = 'scoped memory for tpu_custom_call.1']
    #allocation7 [shape = 'u8[8192]{0}', space=vmem, size = 0x2000, scoped, tag = 'output window, operand 0, single buffered']
    %11 = vsyncpa [#allocation3], 0
    %12 = vsyncpa [#allocation6], 0
    %13 = vsyncpa [#allocation4], 0
    // Predicated region
    $region2: #{tpu_custom_call.1} parent=1 // pred_check
      _
    $region3: #{tpu_custom_call.1} parent=1 // pred_check_branch
      %15 = sbr.rel (0) target = $region5
    $region4: #{tpu_custom_call.1} parent=1 // pred_region
      %s17 = ssub.s32 256, 256
      %18 = vsyncadd [#allocation3], %s17
      %s19 = sshll.u32 [#allocation2], 4
      %s20 = int_to_ptr.vmem [resolvable:$true] %s19
      %25 = dma.hbm_to_vmem [thread:$0]  %s0, 256, %s20, [#allocation3], 128, 128, 8
    $region5: #{tpu_custom_call.1} parent=1 // pred_fallthru
      _
    // Predicated region
    $region6: #{tpu_custom_call.1} parent=1 // pred_check
      _
    $region7: #{tpu_custom_call.1} parent=1 // pred_check_branch
      %27 = sbr.rel (0) target = $region9
    $region8: #{tpu_custom_call.1} parent=1 // pred_region
      %s29 = ssub.s32 128, 128
      %30 = vsyncadd [#allocation6], %s29
      %s32 = sshll.u32 [#allocation5], 4
      %s33 = int_to_ptr.vmem [resolvable:$true] %s32
      %35 = dma.hbm_to_vmem [thread:$0]  %s1, 128, %s33, [#allocation6]
    $region9: #{tpu_custom_call.1} parent=1 // pred_fallthru
      _
    // Predicated region
    $region10: #{tpu_custom_call.1} parent=1 // pred_check
      _
    $region11: #{tpu_custom_call.1} parent=1 // pred_check_branch
      %37 = sbr.rel (0) target = $region13
    $region12: #{tpu_custom_call.1} parent=1 // pred_region
      _
    $region13: #{tpu_custom_call.1} parent=1 // pred_fallthru
      _
    // Predicated region
    $region14: #{tpu_custom_call.1} parent=1 // pred_check
      _
    $region15: #{tpu_custom_call.1} parent=1 // pred_check_branch
      %39 = sbr.rel (0) target = $region17
    $region16: #{tpu_custom_call.1} parent=1 // pred_region
      _
    $region17: #{tpu_custom_call.1} parent=1 // pred_fallthru
      _
    // Predicated region
    $region18: #{tpu_custom_call.1} parent=1 // pred_check
      _
    $region19: #{tpu_custom_call.1} parent=1 // pred_check_branch
      %41 = sbr.rel (0) target = $region21
    $region20: #{tpu_custom_call.1} parent=1 // pred_region
      _
    $region21: #{tpu_custom_call.1} parent=1 // pred_fallthru
      _
    // Predicated region
    $region22: #{tpu_custom_call.1} parent=1 // pred_check
      _
    $region23: #{tpu_custom_call.1} parent=1 // pred_check_branch
      %43 = sbr.rel (0) target = $region25
    $region24: #{tpu_custom_call.1} parent=1 // pred_region
      _
    $region25: #{tpu_custom_call.1} parent=1 // pred_fallthru
      _
    // Predicated region
    $region26: #{tpu_custom_call.1} parent=1 // pred_check
      _
    $region27: #{tpu_custom_call.1} parent=1 // pred_check_branch
      %45 = sbr.rel (0) target = $region29
    $region28: #{tpu_custom_call.1} parent=1 // pred_region
      %46 = dma.done [#allocation3], 256
    $region29: #{tpu_custom_call.1} parent=1 // pred_fallthru
      _
    // Predicated region
    $region30: #{tpu_custom_call.1} parent=1 // pred_check
      _
    $region31: #{tpu_custom_call.1} parent=1 // pred_check_branch
      %48 = sbr.rel (0) target = $region33
    $region32: #{tpu_custom_call.1} parent=1 // pred_region
      %49 = dma.done [#allocation6], 128
    $region33: #{tpu_custom_call.1} parent=1 // pred_fallthru
      _
    %v50 = vld [vmem:[#allocation2] sm:$0xff]
    %v51 = vld [vmem:[#allocation2 + $0x8] sm:$0xff]
    %v52 = vld [vmem:[#allocation5] sm:$0xff]
    %v53 = vld [vmem:[%s2] sm:$0x1]
    %v55 = vlaneseq
    %v56 = vshrl.u32 %v55, 7
    %v57 = vsub.s32 0, %v56
    %v58 = vrot.slane %v53, %v57
    %vm60 = vcmask 64512
    %v62 = vsel %vm60, %v50, 0
    %v65 = vsel %vm60, %v51, 0
    %67 = vmatprep.subr.mxu0 0.0
    %68 = vmatpush1.msra.mxu0 %v52
    %69 = vmatprep.subr.mxu0 0.0
    %70 = vmatpush1.msra.mxu0 0.0
    %71 = vmatprep.subr.mxu0 0.0
    %72 = vmatpush1.msra.mxu0 0.0
    %73 = vmatprep.subr.mxu0 0.0
    %74 = vmatpush1.msra.mxu0 0.0
    %75 = vmatprep.subr.mxu0 0.0
    %76 = vmatpush1.msra.mxu0 0.0
    %77 = vmatprep.subr.mxu0 0.0
    %78 = vmatpush1.msra.mxu0 0.0
    %79 = vmatprep.subr.mxu0 0.0
    %80 = vmatpush1.msra.mxu0 0.0
    %81 = vmatprep.subr.mxu0 0.0
    %82 = vmatpush1.msra.mxu0 0.0
    %83 = vmatprep.subr.mxu0 0.0
    %84 = vmatpush1.msra.mxu0 0.0
    %85 = vmatprep.subr.mxu0 0.0
    %86 = vmatpush1.msra.mxu0 0.0
    %87 = vmatprep.subr.mxu0 0.0
    %88 = vmatpush1.msra.mxu0 0.0
    %89 = vmatprep.subr.mxu0 0.0
    %90 = vmatpush1.msra.mxu0 0.0
    %91 = vmatprep.subr.mxu0 0.0
    %92 = vmatpush1.msra.mxu0 0.0
    %93 = vmatprep.subr.mxu0 0.0
    %94 = vmatpush1.msra.mxu0 0.0
    %95 = vmatprep.subr.mxu0 0.0
    %96 = vmatpush1.msra.mxu0 0.0
    %97 = vmatprep.subr.mxu0 0.0
    %98 = vmatpush1.msra.mxu0 0.0
    %99 = vmatprep.subr.mxu0 0.0
    %100 = vmatpush1.msra.mxu0 0.0
    %101 = vmatprep.subr.mxu0 0.0
    %102 = vmatpush1.msra.mxu0 0.0
    %103 = vmatprep.subr.mxu0 0.0
    %104 = vmatpush1.msra.mxu0 0.0
    %105 = vmatprep.subr.mxu0 0.0
    %106 = vmatpush1.msra.mxu0 0.0
    %107 = vmatprep.subr.mxu0 0.0
    %108 = vmatpush1.msra.mxu0 0.0
    %109 = vmatprep.subr.mxu0 0.0
    %110 = vmatpush1.msra.mxu0 0.0
    %111 = vmatprep.subr.mxu0 0.0
    %112 = vmatpush1.msra.mxu0 0.0
    %113 = vmatprep.subr.mxu0 0.0
    %114 = vmatpush1.msra.mxu0 0.0
    %115 = vmatprep.subr.mxu0 0.0
    %116 = vmatpush1.msra.mxu0 0.0
    %117 = vmatprep.subr.mxu0 0.0
    %118 = vmatpush1.msra.mxu0 0.0
    %119 = vmatprep.subr.mxu0 0.0
    %120 = vmatpush1.msra.mxu0 0.0
    %121 = vmatprep.subr.mxu0 0.0
    %122 = vmatpush1.msra.mxu0 0.0
    %123 = vmatprep.subr.mxu0 0.0
    %124 = vmatpush1.msra.mxu0 0.0
    %125 = vmatprep.subr.mxu0 0.0
    %126 = vmatpush1.msra.mxu0 0.0
    %127 = vmatprep.subr.mxu0 0.0
    %128 = vmatpush1.msra.mxu0 0.0
    %129 = vmatprep.subr.mxu0 0.0
    %130 = vmatpush1.msra.mxu0 0.0
    %131 = vmatprep.mubr.f32.mxu0 0.0
    %132 = vmatmul.mubr.f32.gmra.mrb[0].mxu0 %v62
    %v133 = vpop.f32.mrb[0].mxu0
    %v134 = vadd.f32 %v58, %v133
    %v135 = vpop.f32.mrb[0].mxu0
    %136 = vmatprep.mubr.f32.mxu0 0.0
    %137 = vmatmul.mubr.f32.gmra.mrb[0].mxu0 %v65
    %v138 = vpop.f32.mrb[0].mxu0
    %v139 = vadd.f32 %v58, %v138
    %v140 = vpop.f32.mrb[0].mxu0
    %141 = vdwg.mxu0
    %v142 = vld [vmem:[%s3] sm:$0x3]
    %v143 = vmul.f32 %v134, 0.5
    %145 = vrot.lane.b32.xlu0 %v134, 120
    %v146 = vpop.permute.xlu0 %145
    %vm147 = vcmask 31744
    %v149 = vsel %vm147, %v143, 0
    %v151 = vsel %vm147, %v146, 0
    %153 = vmatprep.subr.mxu0 0.0
    %154 = vmatpush1.xpose.msra.mxu0 %v151
    %155 = vmatprep.subr.mxu0 0.0
    %156 = vmatpush1.xpose.msra.mxu0 0.0
    %157 = vmatprep.subr.mxu0 0.0
    %158 = vmatpush1.xpose.msra.mxu0 0.0
    %159 = vmatprep.subr.mxu0 0.0
    %160 = vmatpush1.xpose.msra.mxu0 0.0
    %161 = vmatprep.subr.mxu0 0.0
    %162 = vmatpush1.xpose.msra.mxu0 0.0
    %163 = vmatprep.subr.mxu0 0.0
    %164 = vmatpush1.xpose.msra.mxu0 0.0
    %165 = vmatprep.subr.mxu0 0.0
    %166 = vmatpush1.xpose.msra.mxu0 0.0
    %167 = vmatprep.subr.mxu0 0.0
    %168 = vmatpush1.xpose.msra.mxu0 0.0
    %169 = vmatprep.subr.mxu0 0.0
    %170 = vmatpush1.xpose.msra.mxu0 0.0
    %171 = vmatprep.subr.mxu0 0.0
    %172 = vmatpush1.xpose.msra.mxu0 0.0
    %173 = vmatprep.subr.mxu0 0.0
    %174 = vmatpush1.xpose.msra.mxu0 0.0
    %175 = vmatprep.subr.mxu0 0.0
    %176 = vmatpush1.xpose.msra.mxu0 0.0
    %177 = vmatprep.subr.mxu0 0.0
    %178 = vmatpush1.xpose.msra.mxu0 0.0
    %179 = vmatprep.subr.mxu0 0.0
    %180 = vmatpush1.xpose.msra.mxu0 0.0
    %181 = vmatprep.subr.mxu0 0.0
    %182 = vmatpush1.xpose.msra.mxu0 0.0
    %183 = vmatprep.subr.mxu0 0.0
    %184 = vmatpush1.xpose.msra.mxu0 0.0
    %185 = vmatprep.subr.mxu0 0.0
    %186 = vmatpush1.xpose.msra.mxu0 0.0
    %187 = vmatprep.subr.mxu0 0.0
    %188 = vmatpush1.xpose.msra.mxu0 0.0
    %189 = vmatprep.subr.mxu0 0.0
    %190 = vmatpush1.xpose.msra.mxu0 0.0
    %191 = vmatprep.subr.mxu0 0.0
    %192 = vmatpush1.xpose.msra.mxu0 0.0
    %193 = vmatprep.subr.mxu0 0.0
    %194 = vmatpush1.xpose.msra.mxu0 0.0
    %195 = vmatprep.subr.mxu0 0.0
    %196 = vmatpush1.xpose.msra.mxu0 0.0
    %197 = vmatprep.subr.mxu0 0.0
    %198 = vmatpush1.xpose.msra.mxu0 0.0
    %199 = vmatprep.subr.mxu0 0.0
    %200 = vmatpush1.xpose.msra.mxu0 0.0
    %201 = vmatprep.subr.mxu0 0.0
    %202 = vmatpush1.xpose.msra.mxu0 0.0
    %203 = vmatprep.subr.mxu0 0.0
    %204 = vmatpush1.xpose.msra.mxu0 0.0
    %205 = vmatprep.subr.mxu0 0.0
    %206 = vmatpush1.xpose.msra.mxu0 0.0
    %207 = vmatprep.subr.mxu0 0.0
    %208 = vmatpush1.xpose.msra.mxu0 0.0
    %209 = vmatprep.subr.mxu0 0.0
    %210 = vmatpush1.xpose.msra.mxu0 0.0
    %211 = vmatprep.subr.mxu0 0.0
    %212 = vmatpush1.xpose.msra.mxu0 0.0
    %213 = vmatprep.subr.mxu0 0.0
    %214 = vmatpush1.xpose.msra.mxu0 0.0
    %215 = vmatprep.subr.mxu0 0.0
    %216 = vmatpush1.xpose.msra.mxu0 0.0
    %217 = vmatprep.mubr.f32.mxu0 0.0
    %218 = vmatmul.mubr.f32.gmra.mrb[0].mxu0 %v149
    %v219 = vpop.f32.mrb[0].mxu0
    %v220 = vadd.f32 0.0, %v219
    %v221 = vpop.f32.mrb[0].mxu0
    %222 = vdwg.mxu0
    %v223 = vlaneseq
    %v224 = vshrl.u32 %v223, 7
    %v225 = vsub.s32 0, %v224
    %v226 = vrot.slane %v142, %v225
    %v227 = vmul.f32 %v143, %v226
    %v228 = vsel %vm147, %v227, 0.0
    %229 = vadd.xlane.f32.xlu0 %v228
    %v230 = vpop.xlane.xlu0 %229
    %v231 = vsel %vm60, %v220, -inf
    %232 = vmax.xlane.f32.xlu0 %v231
    %v233 = vpop.xlane.xlu0 %232
    %v234 = vmax.f32 %v233, %v230
    %v235 = vsub.f32 %v220, %v234
    %v236 = vmul.f32 %v235, 1.442695
    %v237 = vpow.pop %v236
    %v238 = vsub.f32 %v230, %v234
    %v239 = vmul.f32 %v238, 1.442695
    %v240 = vpow.pop %v239
    %v241 = vsel %vm60, %v237, 0.0
    %242 = vadd.xlane.f32.xlu0 %v241
    %v243 = vpop.xlane.xlu0 %242
    %v244 = vadd.f32 %v243, %v240
    %v245 = vlaneseq
    %v246 = vshrl.u32 %v245, 7
    %v247 = vsub.s32 1, %v246
    %v248 = vrot.slane %v142, %v247
    %v249 = vmul.f32 %v240, %v248
    %250 = vrot.lane.b32.xlu0 %v134, 112
    %v251 = vpop.permute.xlu0 %250
    %v254 = vsel %vm60, %v237, 0
    %256 = vmatprep.subr.mxu0 0.0
    %257 = vmatpush1.msra.mxu0 %v251
    %258 = vmatprep.subr.mxu0 0.0
    %259 = vmatpush1.msra.mxu0 0.0
    %260 = vmatprep.subr.mxu0 0.0
    %261 = vmatpush1.msra.mxu0 0.0
    %262 = vmatprep.subr.mxu0 0.0
    %263 = vmatpush1.msra.mxu0 0.0
    %264 = vmatprep.subr.mxu0 0.0
    %265 = vmatpush1.msra.mxu0 0.0
    %266 = vmatprep.subr.mxu0 0.0
    %267 = vmatpush1.msra.mxu0 0.0
    %268 = vmatprep.subr.mxu0 0.0
    %269 = vmatpush1.msra.mxu0 0.0
    %270 = vmatprep.subr.mxu0 0.0
    %271 = vmatpush1.msra.mxu0 0.0
    %272 = vmatprep.subr.mxu0 0.0
    %273 = vmatpush1.msra.mxu0 0.0
    %274 = vmatprep.subr.mxu0 0.0
    %275 = vmatpush1.msra.mxu0 0.0
    %276 = vmatprep.subr.mxu0 0.0
    %277 = vmatpush1.msra.mxu0 0.0
    %278 = vmatprep.subr.mxu0 0.0
    %279 = vmatpush1.msra.mxu0 0.0
    %280 = vmatprep.subr.mxu0 0.0
    %281 = vmatpush1.msra.mxu0 0.0
    %282 = vmatprep.subr.mxu0 0.0
    %283 = vmatpush1.msra.mxu0 0.0
    %284 = vmatprep.subr.mxu0 0.0
    %285 = vmatpush1.msra.mxu0 0.0
    %286 = vmatprep.subr.mxu0 0.0
    %287 = vmatpush1.msra.mxu0 0.0
    %288 = vmatprep.subr.mxu0 0.0
    %289 = vmatpush1.msra.mxu0 0.0
    %290 = vmatprep.subr.mxu0 0.0
    %291 = vmatpush1.msra.mxu0 0.0
    %292 = vmatprep.subr.mxu0 0.0
    %293 = vmatpush1.msra.mxu0 0.0
    %294 = vmatprep.subr.mxu0 0.0
    %295 = vmatpush1.msra.mxu0 0.0
    %296 = vmatprep.subr.mxu0 0.0
    %297 = vmatpush1.msra.mxu0 0.0
    %298 = vmatprep.subr.mxu0 0.0
    %299 = vmatpush1.msra.mxu0 0.0
    %300 = vmatprep.subr.mxu0 0.0
    %301 = vmatpush1.msra.mxu0 0.0
    %302 = vmatprep.subr.mxu0 0.0
    %303 = vmatpush1.msra.mxu0 0.0
    %304 = vmatprep.subr.mxu0 0.0
    %305 = vmatpush1.msra.mxu0 0.0
    %306 = vmatprep.subr.mxu0 0.0
    %307 = vmatpush1.msra.mxu0 0.0
    %308 = vmatprep.subr.mxu0 0.0
    %309 = vmatpush1.msra.mxu0 0.0
    %310 = vmatprep.subr.mxu0 0.0
    %311 = vmatpush1.msra.mxu0 0.0
    %312 = vmatprep.subr.mxu0 0.0
    %313 = vmatpush1.msra.mxu0 0.0
    %314 = vmatprep.subr.mxu0 0.0
    %315 = vmatpush1.msra.mxu0 0.0
    %316 = vmatprep.subr.mxu0 0.0
    %317 = vmatpush1.msra.mxu0 0.0
    %318 = vmatprep.subr.mxu0 0.0
    %319 = vmatpush1.msra.mxu0 0.0
    %320 = vmatprep.mubr.f32.mxu0 0.0
    %321 = vmatmul.mubr.f32.gmra.mrb[0].mxu0 %v254
    %v322 = vpop.f32.mrb[0].mxu0
    %v323 = vadd.f32 %v249, %v322
    %v324 = vpop.f32.mrb[0].mxu0
    %325 = vdwg.mxu0
    %v326 = vrcp.pop %v244
    %v327 = vmul.f32 %v323, %v326
    %328 = vrot.lane.b32.xlu0 %v143, 124
    %v329 = vpop.permute.xlu0 %328
    %330 = vrot.lane.b32.xlu0 %v134, 116
    %v331 = vpop.permute.xlu0 %330
    %v332 = vsel %vm147, %v329, 0
    %v334 = vsel %vm147, %v331, 0
    %336 = vmatprep.subr.mxu0 0.0
    %337 = vmatpush1.xpose.msra.mxu0 %v334
    %338 = vmatprep.subr.mxu0 0.0
    %339 = vmatpush1.xpose.msra.mxu0 0.0
    %340 = vmatprep.subr.mxu0 0.0
    %341 = vmatpush1.xpose.msra.mxu0 0.0
    %342 = vmatprep.subr.mxu0 0.0
    %343 = vmatpush1.xpose.msra.mxu0 0.0
    %344 = vmatprep.subr.mxu0 0.0
    %345 = vmatpush1.xpose.msra.mxu0 0.0
    %346 = vmatprep.subr.mxu0 0.0
    %347 = vmatpush1.xpose.msra.mxu0 0.0
    %348 = vmatprep.subr.mxu0 0.0
    %349 = vmatpush1.xpose.msra.mxu0 0.0
    %350 = vmatprep.subr.mxu0 0.0
    %351 = vmatpush1.xpose.msra.mxu0 0.0
    %352 = vmatprep.subr.mxu0 0.0
    %353 = vmatpush1.xpose.msra.mxu0 0.0
    %354 = vmatprep.subr.mxu0 0.0
    %355 = vmatpush1.xpose.msra.mxu0 0.0
    %356 = vmatprep.subr.mxu0 0.0
    %357 = vmatpush1.xpose.msra.mxu0 0.0
    %358 = vmatprep.subr.mxu0 0.0
    %359 = vmatpush1.xpose.msra.mxu0 0.0
    %360 = vmatprep.subr.mxu0 0.0
    %361 = vmatpush1.xpose.msra.mxu0 0.0
    %362 = vmatprep.subr.mxu0 0.0
    %363 = vmatpush1.xpose.msra.mxu0 0.0
    %364 = vmatprep.subr.mxu0 0.0
    %365 = vmatpush1.xpose.msra.mxu0 0.0
    %366 = vmatprep.subr.mxu0 0.0
    %367 = vmatpush1.xpose.msra.mxu0 0.0
    %368 = vmatprep.subr.mxu0 0.0
    %369 = vmatpush1.xpose.msra.mxu0 0.0
    %370 = vmatprep.subr.mxu0 0.0
    %371 = vmatpush1.xpose.msra.mxu0 0.0
    %372 = vmatprep.subr.mxu0 0.0
    %373 = vmatpush1.xpose.msra.mxu0 0.0
    %374 = vmatprep.subr.mxu0 0.0
    %375 = vmatpush1.xpose.msra.mxu0 0.0
    %376 = vmatprep.subr.mxu0 0.0
    %377 = vmatpush1.xpose.msra.mxu0 0.0
    %378 = vmatprep.subr.mxu0 0.0
    %379 = vmatpush1.xpose.msra.mxu0 0.0
    %380 = vmatprep.subr.mxu0 0.0
    %381 = vmatpush1.xpose.msra.mxu0 0.0
    %382 = vmatprep.subr.mxu0 0.0
    %383 = vmatpush1.xpose.msra.mxu0 0.0
    %384 = vmatprep.subr.mxu0 0.0
    %385 = vmatpush1.xpose.msra.mxu0 0.0
    %386 = vmatprep.subr.mxu0 0.0
    %387 = vmatpush1.xpose.msra.mxu0 0.0
    %388 = vmatprep.subr.mxu0 0.0
    %389 = vmatpush1.xpose.msra.mxu0 0.0
    %390 = vmatprep.subr.mxu0 0.0
    %391 = vmatpush1.xpose.msra.mxu0 0.0
    %392 = vmatprep.subr.mxu0 0.0
    %393 = vmatpush1.xpose.msra.mxu0 0.0
    %394 = vmatprep.subr.mxu0 0.0
    %395 = vmatpush1.xpose.msra.mxu0 0.0
    %396 = vmatprep.subr.mxu0 0.0
    %397 = vmatpush1.xpose.msra.mxu0 0.0
    %398 = vmatprep.subr.mxu0 0.0
    %399 = vmatpush1.xpose.msra.mxu0 0.0
    %400 = vmatprep.mubr.f32.mxu0 0.0
    %401 = vmatmul.mubr.f32.gmra.mrb[0].mxu0 %v332
    %v402 = vpop.f32.mrb[0].mxu0
    %v403 = vadd.f32 0.0, %v402
    %v404 = vpop.f32.mrb[0].mxu0
    %405 = vdwg.mxu0
    %407 = vrot.lane.b32.xlu0 %v227, 124
    %v408 = vpop.permute.xlu0 %407
    %v410 = vsel %vm147, %v408, 0.0
    %411 = vadd.xlane.f32.xlu0 %v410
    %v412 = vpop.xlane.xlu0 %411
    %v413 = vsel %vm60, %v403, -inf
    %414 = vmax.xlane.f32.xlu0 %v413
    %v415 = vpop.xlane.xlu0 %414
    %v416 = vmax.f32 %v415, %v412
    %v417 = vsub.f32 %v403, %v416
    %v418 = vmul.f32 %v417, 1.442695
    %v419 = vpow.pop %v418
    %v420 = vsub.f32 %v412, %v416
    %v421 = vmul.f32 %v420, 1.442695
    %v422 = vpow.pop %v421
    %v423 = vsel %vm60, %v419, 0.0
    %424 = vadd.xlane.f32.xlu0 %v423
    %v425 = vpop.xlane.xlu0 %424
    %v426 = vadd.f32 %v425, %v422
    %v427 = vmul.f32 %v422, %v248
    %428 = vrot.lane.b32.xlu0 %v134, 108
    %v429 = vpop.permute.xlu0 %428
    %432 = vrot.lane.b32.xlu0 %v427, 124
    %v433 = vpop.permute.xlu0 %432
    %v436 = vsel %vm60, %v419, 0
    %438 = vmatprep.subr.mxu0 0.0
    %439 = vmatpush1.msra.mxu0 %v429
    %440 = vmatprep.subr.mxu0 0.0
    %441 = vmatpush1.msra.mxu0 0.0
    %442 = vmatprep.subr.mxu0 0.0
    %443 = vmatpush1.msra.mxu0 0.0
    %444 = vmatprep.subr.mxu0 0.0
    %445 = vmatpush1.msra.mxu0 0.0
    %446 = vmatprep.subr.mxu0 0.0
    %447 = vmatpush1.msra.mxu0 0.0
    %448 = vmatprep.subr.mxu0 0.0
    %449 = vmatpush1.msra.mxu0 0.0
    %450 = vmatprep.subr.mxu0 0.0
    %451 = vmatpush1.msra.mxu0 0.0
    %452 = vmatprep.subr.mxu0 0.0
    %453 = vmatpush1.msra.mxu0 0.0
    %454 = vmatprep.subr.mxu0 0.0
    %455 = vmatpush1.msra.mxu0 0.0
    %456 = vmatprep.subr.mxu0 0.0
    %457 = vmatpush1.msra.mxu0 0.0
    %458 = vmatprep.subr.mxu0 0.0
    %459 = vmatpush1.msra.mxu0 0.0
    %460 = vmatprep.subr.mxu0 0.0
    %461 = vmatpush1.msra.mxu0 0.0
    %462 = vmatprep.subr.mxu0 0.0
    %463 = vmatpush1.msra.mxu0 0.0
    %464 = vmatprep.subr.mxu0 0.0
    %465 = vmatpush1.msra.mxu0 0.0
    %466 = vmatprep.subr.mxu0 0.0
    %467 = vmatpush1.msra.mxu0 0.0
    %468 = vmatprep.subr.mxu0 0.0
    %469 = vmatpush1.msra.mxu0 0.0
    %470 = vmatprep.subr.mxu0 0.0
    %471 = vmatpush1.msra.mxu0 0.0
    %472 = vmatprep.subr.mxu0 0.0
    %473 = vmatpush1.msra.mxu0 0.0
    %474 = vmatprep.subr.mxu0 0.0
    %475 = vmatpush1.msra.mxu0 0.0
    %476 = vmatprep.subr.mxu0 0.0
    %477 = vmatpush1.msra.mxu0 0.0
    %478 = vmatprep.subr.mxu0 0.0
    %479 = vmatpush1.msra.mxu0 0.0
    %480 = vmatprep.subr.mxu0 0.0
    %481 = vmatpush1.msra.mxu0 0.0
    %482 = vmatprep.subr.mxu0 0.0
    %483 = vmatpush1.msra.mxu0 0.0
    %484 = vmatprep.subr.mxu0 0.0
    %485 = vmatpush1.msra.mxu0 0.0
    %486 = vmatprep.subr.mxu0 0.0
    %487 = vmatpush1.msra.mxu0 0.0
    %488 = vmatprep.subr.mxu0 0.0
    %489 = vmatpush1.msra.mxu0 0.0
    %490 = vmatprep.subr.mxu0 0.0
    %491 = vmatpush1.msra.mxu0 0.0
    %492 = vmatprep.subr.mxu0 0.0
    %493 = vmatpush1.msra.mxu0 0.0
    %494 = vmatprep.subr.mxu0 0.0
    %495 = vmatpush1.msra.mxu0 0.0
    %496 = vmatprep.subr.mxu0 0.0
    %497 = vmatpush1.msra.mxu0 0.0
    %498 = vmatprep.subr.mxu0 0.0
    %499 = vmatpush1.msra.mxu0 0.0
    %500 = vmatprep.subr.mxu0 0.0
    %501 = vmatpush1.msra.mxu0 0.0
    %502 = vmatprep.mubr.f32.mxu0 0.0
    %503 = vmatmul.mubr.f32.gmra.mrb[0].mxu0 %v436
    %v504 = vpop.f32.mrb[0].mxu0
    %v505 = vadd.f32 %v433, %v504
    %v506 = vpop.f32.mrb[0].mxu0
    %507 = vdwg.mxu0
    %v508 = vrcp.pop %v426
    %v509 = vmul.f32 %v505, %v508
    %511 = vrot.lane.b32.xlu0 %v509, 4
    %v512 = vpop.permute.xlu0 %511
    %v514 = vsel %vm147, %v327, %v512
    %v515 = vmul.f32 %v139, 0.5
    %517 = vrot.lane.b32.xlu0 %v139, 120
    %v518 = vpop.permute.xlu0 %517
    %v520 = vsel %vm147, %v515, 0
    %v522 = vsel %vm147, %v518, 0
    %524 = vmatprep.subr.mxu0 0.0
    %525 = vmatpush1.xpose.msra.mxu0 %v522
    %526 = vmatprep.subr.mxu0 0.0
    %527 = vmatpush1.xpose.msra.mxu0 0.0
    %528 = vmatprep.subr.mxu0 0.0
    %529 = vmatpush1.xpose.msra.mxu0 0.0
    %530 = vmatprep.subr.mxu0 0.0
    %531 = vmatpush1.xpose.msra.mxu0 0.0
    %532 = vmatprep.subr.mxu0 0.0
    %533 = vmatpush1.xpose.msra.mxu0 0.0
    %534 = vmatprep.subr.mxu0 0.0
    %535 = vmatpush1.xpose.msra.mxu0 0.0
    %536 = vmatprep.subr.mxu0 0.0
    %537 = vmatpush1.xpose.msra.mxu0 0.0
    %538 = vmatprep.subr.mxu0 0.0
    %539 = vmatpush1.xpose.msra.mxu0 0.0
    %540 = vmatprep.subr.mxu0 0.0
    %541 = vmatpush1.xpose.msra.mxu0 0.0
    %542 = vmatprep.subr.mxu0 0.0
    %543 = vmatpush1.xpose.msra.mxu0 0.0
    %544 = vmatprep.subr.mxu0 0.0
    %545 = vmatpush1.xpose.msra.mxu0 0.0
    %546 = vmatprep.subr.mxu0 0.0
    %547 = vmatpush1.xpose.msra.mxu0 0.0
    %548 = vmatprep.subr.mxu0 0.0
    %549 = vmatpush1.xpose.msra.mxu0 0.0
    %550 = vmatprep.subr.mxu0 0.0
    %551 = vmatpush1.xpose.msra.mxu0 0.0
    %552 = vmatprep.subr.mxu0 0.0
    %553 = vmatpush1.xpose.msra.mxu0 0.0
    %554 = vmatprep.subr.mxu0 0.0
    %555 = vmatpush1.xpose.msra.mxu0 0.0
    %556 = vmatprep.subr.mxu0 0.0
    %557 = vmatpush1.xpose.msra.mxu0 0.0
    %558 = vmatprep.subr.mxu0 0.0
    %559 = vmatpush1.xpose.msra.mxu0 0.0
    %560 = vmatprep.subr.mxu0 0.0
    %561 = vmatpush1.xpose.msra.mxu0 0.0
    %562 = vmatprep.subr.mxu0 0.0
    %563 = vmatpush1.xpose.msra.mxu0 0.0
    %564 = vmatprep.subr.mxu0 0.0
    %565 = vmatpush1.xpose.msra.mxu0 0.0
    %566 = vmatprep.subr.mxu0 0.0
    %567 = vmatpush1.xpose.msra.mxu0 0.0
    %568 = vmatprep.subr.mxu0 0.0
    %569 = vmatpush1.xpose.msra.mxu0 0.0
    %570 = vmatprep.subr.mxu0 0.0
    %571 = vmatpush1.xpose.msra.mxu0 0.0
    %572 = vmatprep.subr.mxu0 0.0
    %573 = vmatpush1.xpose.msra.mxu0 0.0
    %574 = vmatprep.subr.mxu0 0.0
    %575 = vmatpush1.xpose.msra.mxu0 0.0
    %576 = vmatprep.subr.mxu0 0.0
    %577 = vmatpush1.xpose.msra.mxu0 0.0
    %578 = vmatprep.subr.mxu0 0.0
    %579 = vmatpush1.xpose.msra.mxu0 0.0
    %580 = vmatprep.subr.mxu0 0.0
    %581 = vmatpush1.xpose.msra.mxu0 0.0
    %582 = vmatprep.subr.mxu0 0.0
    %583 = vmatpush1.xpose.msra.mxu0 0.0
    %584 = vmatprep.subr.mxu0 0.0
    %585 = vmatpush1.xpose.msra.mxu0 0.0
    %586 = vmatprep.subr.mxu0 0.0
    %587 = vmatpush1.xpose.msra.mxu0 0.0
    %588 = vmatprep.mubr.f32.mxu0 0.0
    %589 = vmatmul.mubr.f32.gmra.mrb[0].mxu0 %v520
    %v590 = vpop.f32.mrb[0].mxu0
    %v591 = vadd.f32 0.0, %v590
    %v592 = vpop.f32.mrb[0].mxu0
    %593 = vdwg.mxu0
    %v594 = vmul.f32 %v515, %v226
    %v595 = vsel %vm147, %v594, 0.0
    %596 = vadd.xlane.f32.xlu0 %v595
    %v597 = vpop.xlane.xlu0 %596
    %v598 = vsel %vm60, %v591, -inf
    %599 = vmax.xlane.f32.xlu0 %v598
    %v600 = vpop.xlane.xlu0 %599
    %v601 = vmax.f32 %v600, %v597
    %v602 = vsub.f32 %v591, %v601
    %v603 = vmul.f32 %v602, 1.442695
    %v604 = vpow.pop %v603
    %v605 = vsub.f32 %v597, %v601
    %v606 = vmul.f32 %v605, 1.442695
    %v607 = vpow.pop %v606
    %v608 = vsel %vm60, %v604, 0.0
    %609 = vadd.xlane.f32.xlu0 %v608
    %v610 = vpop.xlane.xlu0 %609
    %v611 = vadd.f32 %v610, %v607
    %v612 = vmul.f32 %v607, %v248
    %613 = vrot.lane.b32.xlu0 %v139, 112
    %v614 = vpop.permute.xlu0 %613
    %v617 = vsel %vm60, %v604, 0
    %619 = vmatprep.subr.mxu0 0.0
    %620 = vmatpush1.msra.mxu0 %v614
    %621 = vmatprep.subr.mxu0 0.0
    %622 = vmatpush1.msra.mxu0 0.0
    %623 = vmatprep.subr.mxu0 0.0
    %624 = vmatpush1.msra.mxu0 0.0
    %625 = vmatprep.subr.mxu0 0.0
    %626 = vmatpush1.msra.mxu0 0.0
    %627 = vmatprep.subr.mxu0 0.0
    %628 = vmatpush1.msra.mxu0 0.0
    %629 = vmatprep.subr.mxu0 0.0
    %630 = vmatpush1.msra.mxu0 0.0
    %631 = vmatprep.subr.mxu0 0.0
    %632 = vmatpush1.msra.mxu0 0.0
    %633 = vmatprep.subr.mxu0 0.0
    %634 = vmatpush1.msra.mxu0 0.0
    %635 = vmatprep.subr.mxu0 0.0
    %636 = vmatpush1.msra.mxu0 0.0
    %637 = vmatprep.subr.mxu0 0.0
    %638 = vmatpush1.msra.mxu0 0.0
    %639 = vmatprep.subr.mxu0 0.0
    %640 = vmatpush1.msra.mxu0 0.0
    %641 = vmatprep.subr.mxu0 0.0
    %642 = vmatpush1.msra.mxu0 0.0
    %643 = vmatprep.subr.mxu0 0.0
    %644 = vmatpush1.msra.mxu0 0.0
    %645 = vmatprep.subr.mxu0 0.0
    %646 = vmatpush1.msra.mxu0 0.0
    %647 = vmatprep.subr.mxu0 0.0
    %648 = vmatpush1.msra.mxu0 0.0
    %649 = vmatprep.subr.mxu0 0.0
    %650 = vmatpush1.msra.mxu0 0.0
    %651 = vmatprep.subr.mxu0 0.0
    %652 = vmatpush1.msra.mxu0 0.0
    %653 = vmatprep.subr.mxu0 0.0
    %654 = vmatpush1.msra.mxu0 0.0
    %655 = vmatprep.subr.mxu0 0.0
    %656 = vmatpush1.msra.mxu0 0.0
    %657 = vmatprep.subr.mxu0 0.0
    %658 = vmatpush1.msra.mxu0 0.0
    %659 = vmatprep.subr.mxu0 0.0
    %660 = vmatpush1.msra.mxu0 0.0
    %661 = vmatprep.subr.mxu0 0.0
    %662 = vmatpush1.msra.mxu0 0.0
    %663 = vmatprep.subr.mxu0 0.0
    %664 = vmatpush1.msra.mxu0 0.0
    %665 = vmatprep.subr.mxu0 0.0
    %666 = vmatpush1.msra.mxu0 0.0
    %667 = vmatprep.subr.mxu0 0.0
    %668 = vmatpush1.msra.mxu0 0.0
    %669 = vmatprep.subr.mxu0 0.0
    %670 = vmatpush1.msra.mxu0 0.0
    %671 = vmatprep.subr.mxu0 0.0
    %672 = vmatpush1.msra.mxu0 0.0
    %673 = vmatprep.subr.mxu0 0.0
    %674 = vmatpush1.msra.mxu0 0.0
    %675 = vmatprep.subr.mxu0 0.0
    %676 = vmatpush1.msra.mxu0 0.0
    %677 = vmatprep.subr.mxu0 0.0
    %678 = vmatpush1.msra.mxu0 0.0
    %679 = vmatprep.subr.mxu0 0.0
    %680 = vmatpush1.msra.mxu0 0.0
    %681 = vmatprep.subr.mxu0 0.0
    %682 = vmatpush1.msra.mxu0 0.0
    %683 = vmatprep.mubr.f32.mxu0 0.0
    %684 = vmatmul.mubr.f32.gmra.mrb[0].mxu0 %v617
    %v685 = vpop.f32.mrb[0].mxu0
    %v686 = vadd.f32 %v612, %v685
    %v687 = vpop.f32.mrb[0].mxu0
    %688 = vdwg.mxu0
    %v689 = vrcp.pop %v611
    %v690 = vmul.f32 %v686, %v689
    %691 = vrot.lane.b32.xlu0 %v515, 124
    %v692 = vpop.permute.xlu0 %691
    %693 = vrot.lane.b32.xlu0 %v139, 116
    %v694 = vpop.permute.xlu0 %693
    %v695 = vsel %vm147, %v692, 0
    %v697 = vsel %vm147, %v694, 0
    %699 = vmatprep.subr.mxu0 0.0
    %700 = vmatpush1.xpose.msra.mxu0 %v697
    %701 = vmatprep.subr.mxu0 0.0
    %702 = vmatpush1.xpose.msra.mxu0 0.0
    %703 = vmatprep.subr.mxu0 0.0
    %704 = vmatpush1.xpose.msra.mxu0 0.0
    %705 = vmatprep.subr.mxu0 0.0
    %706 = vmatpush1.xpose.msra.mxu0 0.0
    %707 = vmatprep.subr.mxu0 0.0
    %708 = vmatpush1.xpose.msra.mxu0 0.0
    %709 = vmatprep.subr.mxu0 0.0
    %710 = vmatpush1.xpose.msra.mxu0 0.0
    %711 = vmatprep.subr.mxu0 0.0
    %712 = vmatpush1.xpose.msra.mxu0 0.0
    %713 = vmatprep.subr.mxu0 0.0
    %714 = vmatpush1.xpose.msra.mxu0 0.0
    %715 = vmatprep.subr.mxu0 0.0
    %716 = vmatpush1.xpose.msra.mxu0 0.0
    %717 = vmatprep.subr.mxu0 0.0
    %718 = vmatpush1.xpose.msra.mxu0 0.0
    %719 = vmatprep.subr.mxu0 0.0
    %720 = vmatpush1.xpose.msra.mxu0 0.0
    %721 = vmatprep.subr.mxu0 0.0
    %722 = vmatpush1.xpose.msra.mxu0 0.0
    %723 = vmatprep.subr.mxu0 0.0
    %724 = vmatpush1.xpose.msra.mxu0 0.0
    %725 = vmatprep.subr.mxu0 0.0
    %726 = vmatpush1.xpose.msra.mxu0 0.0
    %727 = vmatprep.subr.mxu0 0.0
    %728 = vmatpush1.xpose.msra.mxu0 0.0
    %729 = vmatprep.subr.mxu0 0.0
    %730 = vmatpush1.xpose.msra.mxu0 0.0
    %731 = vmatprep.subr.mxu0 0.0
    %732 = vmatpush1.xpose.msra.mxu0 0.0
    %733 = vmatprep.subr.mxu0 0.0
    %734 = vmatpush1.xpose.msra.mxu0 0.0
    %735 = vmatprep.subr.mxu0 0.0
    %736 = vmatpush1.xpose.msra.mxu0 0.0
    %737 = vmatprep.subr.mxu0 0.0
    %738 = vmatpush1.xpose.msra.mxu0 0.0
    %739 = vmatprep.subr.mxu0 0.0
    %740 = vmatpush1.xpose.msra.mxu0 0.0
    %741 = vmatprep.subr.mxu0 0.0
    %742 = vmatpush1.xpose.msra.mxu0 0.0
    %743 = vmatprep.subr.mxu0 0.0
    %744 = vmatpush1.xpose.msra.mxu0 0.0
    %745 = vmatprep.subr.mxu0 0.0
    %746 = vmatpush1.xpose.msra.mxu0 0.0
    %747 = vmatprep.subr.mxu0 0.0
    %748 = vmatpush1.xpose.msra.mxu0 0.0
    %749 = vmatprep.subr.mxu0 0.0
    %750 = vmatpush1.xpose.msra.mxu0 0.0
    %751 = vmatprep.subr.mxu0 0.0
    %752 = vmatpush1.xpose.msra.mxu0 0.0
    %753 = vmatprep.subr.mxu0 0.0
    %754 = vmatpush1.xpose.msra.mxu0 0.0
    %755 = vmatprep.subr.mxu0 0.0
    %756 = vmatpush1.xpose.msra.mxu0 0.0
    %757 = vmatprep.subr.mxu0 0.0
    %758 = vmatpush1.xpose.msra.mxu0 0.0
    %759 = vmatprep.subr.mxu0 0.0
    %760 = vmatpush1.xpose.msra.mxu0 0.0
    %761 = vmatprep.subr.mxu0 0.0
    %762 = vmatpush1.xpose.msra.mxu0 0.0
    %763 = vmatprep.mubr.f32.mxu0 0.0
    %764 = vmatmul.mubr.f32.gmra.mrb[0].mxu0 %v695
    %v765 = vpop.f32.mrb[0].mxu0
    %v766 = vadd.f32 0.0, %v765
    %v767 = vpop.f32.mrb[0].mxu0
    %768 = vdwg.mxu0
    %770 = vrot.lane.b32.xlu0 %v594, 124
    %v771 = vpop.permute.xlu0 %770
    %v773 = vsel %vm147, %v771, 0.0
    %774 = vadd.xlane.f32.xlu0 %v773
    %v775 = vpop.xlane.xlu0 %774
    %v776 = vsel %vm60, %v766, -inf
    %777 = vmax.xlane.f32.xlu0 %v776
    %v778 = vpop.xlane.xlu0 %777
    %v779 = vmax.f32 %v778, %v775
    %v780 = vsub.f32 %v766, %v779
    %v781 = vmul.f32 %v780, 1.442695
    %v782 = vpow.pop %v781
    %v783 = vsub.f32 %v775, %v779
    %v784 = vmul.f32 %v783, 1.442695
    %v785 = vpow.pop %v784
    %v786 = vsel %vm60, %v782, 0.0
    %787 = vadd.xlane.f32.xlu0 %v786
    %v788 = vpop.xlane.xlu0 %787
    %v789 = vadd.f32 %v788, %v785
    %v790 = vmul.f32 %v785, %v248
    %791 = vrot.lane.b32.xlu0 %v139, 108
    %v792 = vpop.permute.xlu0 %791
    %795 = vrot.lane.b32.xlu0 %v790, 124
    %v796 = vpop.permute.xlu0 %795
    %v799 = vsel %vm60, %v782, 0
    %801 = vmatprep.subr.mxu0 0.0
    %802 = vmatpush1.msra.mxu0 %v792
    %803 = vmatprep.subr.mxu0 0.0
    %804 = vmatpush1.msra.mxu0 0.0
    %805 = vmatprep.subr.mxu0 0.0
    %806 = vmatpush1.msra.mxu0 0.0
    %807 = vmatprep.subr.mxu0 0.0
    %808 = vmatpush1.msra.mxu0 0.0
    %809 = vmatprep.subr.mxu0 0.0
    %810 = vmatpush1.msra.mxu0 0.0
    %811 = vmatprep.subr.mxu0 0.0
    %812 = vmatpush1.msra.mxu0 0.0
    %813 = vmatprep.subr.mxu0 0.0
    %814 = vmatpush1.msra.mxu0 0.0
    %815 = vmatprep.subr.mxu0 0.0
    %816 = vmatpush1.msra.mxu0 0.0
    %817 = vmatprep.subr.mxu0 0.0
    %818 = vmatpush1.msra.mxu0 0.0
    %819 = vmatprep.subr.mxu0 0.0
    %820 = vmatpush1.msra.mxu0 0.0
    %821 = vmatprep.subr.mxu0 0.0
    %822 = vmatpush1.msra.mxu0 0.0
    %823 = vmatprep.subr.mxu0 0.0
    %824 = vmatpush1.msra.mxu0 0.0
    %825 = vmatprep.subr.mxu0 0.0
    %826 = vmatpush1.msra.mxu0 0.0
    %827 = vmatprep.subr.mxu0 0.0
    %828 = vmatpush1.msra.mxu0 0.0
    %829 = vmatprep.subr.mxu0 0.0
    %830 = vmatpush1.msra.mxu0 0.0
    %831 = vmatprep.subr.mxu0 0.0
    %832 = vmatpush1.msra.mxu0 0.0
    %833 = vmatprep.subr.mxu0 0.0
    %834 = vmatpush1.msra.mxu0 0.0
    %835 = vmatprep.subr.mxu0 0.0
    %836 = vmatpush1.msra.mxu0 0.0
    %837 = vmatprep.subr.mxu0 0.0
    %838 = vmatpush1.msra.mxu0 0.0
    %839 = vmatprep.subr.mxu0 0.0
    %840 = vmatpush1.msra.mxu0 0.0
    %841 = vmatprep.subr.mxu0 0.0
    %842 = vmatpush1.msra.mxu0 0.0
    %843 = vmatprep.subr.mxu0 0.0
    %844 = vmatpush1.msra.mxu0 0.0
    %845 = vmatprep.subr.mxu0 0.0
    %846 = vmatpush1.msra.mxu0 0.0
    %847 = vmatprep.subr.mxu0 0.0
    %848 = vmatpush1.msra.mxu0 0.0
    %849 = vmatprep.subr.mxu0 0.0
    %850 = vmatpush1.msra.mxu0 0.0
    %851 = vmatprep.subr.mxu0 0.0
    %852 = vmatpush1.msra.mxu0 0.0
    %853 = vmatprep.subr.mxu0 0.0
    %854 = vmatpush1.msra.mxu0 0.0
    %855 = vmatprep.subr.mxu0 0.0
    %856 = vmatpush1.msra.mxu0 0.0
    %857 = vmatprep.subr.mxu0 0.0
    %858 = vmatpush1.msra.mxu0 0.0
    %859 = vmatprep.subr.mxu0 0.0
    %860 = vmatpush1.msra.mxu0 0.0
    %861 = vmatprep.subr.mxu0 0.0
    %862 = vmatpush1.msra.mxu0 0.0
    %863 = vmatprep.subr.mxu0 0.0
    %864 = vmatpush1.msra.mxu0 0.0
    %865 = vmatprep.mubr.f32.mxu0 0.0
    %866 = vmatmul.mubr.f32.gmra.mrb[0].mxu0 %v799
    %v867 = vpop.f32.mrb[0].mxu0
    %v868 = vadd.f32 %v796, %v867
    %v869 = vpop.f32.mrb[0].mxu0
    %870 = vdwg.mxu0
    %v871 = vrcp.pop %v789
    %v872 = vmul.f32 %v868, %v871
    %874 = vrot.lane.b32.xlu0 %v872, 4
    %v875 = vpop.permute.xlu0 %874
    %v877 = vsel %vm147, %v690, %v875
    %v878 = vld [vmem:[%s4] sm:$0xff]
    %v879 = vld [vmem:[%s5] sm:$0x1]
    %v881 = vlaneseq
    %v882 = vshrl.u32 %v881, 7
    %v883 = vsub.s32 0, %v882
    %v884 = vrot.slane %v879, %v883
    %v887 = vsel %vm60, %v514, 0
    %v890 = vsel %vm60, %v877, 0
    %892 = vmatprep.subr.mxu0 0.0
    %893 = vmatpush1.msra.mxu0 %v878
    %894 = vmatprep.subr.mxu0 0.0
    %895 = vmatpush1.msra.mxu0 0.0
    %896 = vmatprep.subr.mxu0 0.0
    %897 = vmatpush1.msra.mxu0 0.0
    %898 = vmatprep.subr.mxu0 0.0
    %899 = vmatpush1.msra.mxu0 0.0
    %900 = vmatprep.subr.mxu0 0.0
    %901 = vmatpush1.msra.mxu0 0.0
    %902 = vmatprep.subr.mxu0 0.0
    %903 = vmatpush1.msra.mxu0 0.0
    %904 = vmatprep.subr.mxu0 0.0
    %905 = vmatpush1.msra.mxu0 0.0
    %906 = vmatprep.subr.mxu0 0.0
    %907 = vmatpush1.msra.mxu0 0.0
    %908 = vmatprep.subr.mxu0 0.0
    %909 = vmatpush1.msra.mxu0 0.0
    %910 = vmatprep.subr.mxu0 0.0
    %911 = vmatpush1.msra.mxu0 0.0
    %912 = vmatprep.subr.mxu0 0.0
    %913 = vmatpush1.msra.mxu0 0.0
    %914 = vmatprep.subr.mxu0 0.0
    %915 = vmatpush1.msra.mxu0 0.0
    %916 = vmatprep.subr.mxu0 0.0
    %917 = vmatpush1.msra.mxu0 0.0
    %918 = vmatprep.subr.mxu0 0.0
    %919 = vmatpush1.msra.mxu0 0.0
    %920 = vmatprep.subr.mxu0 0.0
    %921 = vmatpush1.msra.mxu0 0.0
    %922 = vmatprep.subr.mxu0 0.0
    %923 = vmatpush1.msra.mxu0 0.0
    %924 = vmatprep.subr.mxu0 0.0
    %925 = vmatpush1.msra.mxu0 0.0
    %926 = vmatprep.subr.mxu0 0.0
    %927 = vmatpush1.msra.mxu0 0.0
    %928 = vmatprep.subr.mxu0 0.0
    %929 = vmatpush1.msra.mxu0 0.0
    %930 = vmatprep.subr.mxu0 0.0
    %931 = vmatpush1.msra.mxu0 0.0
    %932 = vmatprep.subr.mxu0 0.0
    %933 = vmatpush1.msra.mxu0 0.0
    %934 = vmatprep.subr.mxu0 0.0
    %935 = vmatpush1.msra.mxu0 0.0
    %936 = vmatprep.subr.mxu0 0.0
    %937 = vmatpush1.msra.mxu0 0.0
    %938 = vmatprep.subr.mxu0 0.0
    %939 = vmatpush1.msra.mxu0 0.0
    %940 = vmatprep.subr.mxu0 0.0
    %941 = vmatpush1.msra.mxu0 0.0
    %942 = vmatprep.subr.mxu0 0.0
    %943 = vmatpush1.msra.mxu0 0.0
    %944 = vmatprep.subr.mxu0 0.0
    %945 = vmatpush1.msra.mxu0 0.0
    %946 = vmatprep.subr.mxu0 0.0
    %947 = vmatpush1.msra.mxu0 0.0
    %948 = vmatprep.subr.mxu0 0.0
    %949 = vmatpush1.msra.mxu0 0.0
    %950 = vmatprep.subr.mxu0 0.0
    %951 = vmatpush1.msra.mxu0 0.0
    %952 = vmatprep.subr.mxu0 0.0
    %953 = vmatpush1.msra.mxu0 0.0
    %954 = vmatprep.subr.mxu0 0.0
    %955 = vmatpush1.msra.mxu0 0.0
    %956 = vmatprep.mubr.f32.mxu0 0.0
    %957 = vmatmul.mubr.f32.gmra.mrb[0].mxu0 %v887
    %v958 = vpop.f32.mrb[0].mxu0
    %v959 = vadd.f32 %v884, %v958
    %v960 = vpop.f32.mrb[0].mxu0
    %961 = vmatprep.mubr.f32.mxu0 0.0
    %962 = vmatmul.mubr.f32.gmra.mrb[0].mxu0 %v890
    %v963 = vpop.f32.mrb[0].mxu0
    %v964 = vadd.f32 %v884, %v963
    %v965 = vpop.f32.mrb[0].mxu0
    %966 = vdwg.mxu0
    %967 = vst.msk [vmem:[#allocation7] sm:$0xff] %vm60, %v959
    %968 = vst.msk [vmem:[#allocation7 + $0x8] sm:$0xff] %vm60, %v964
    // Predicated region
    $region34: #{tpu_custom_call.1} parent=1 // pred_check
      _
    $region35: #{tpu_custom_call.1} parent=1 // pred_check_branch
      %970 = sbr.rel (0) target = $region37
    $region36: #{tpu_custom_call.1} parent=1 // pred_region
      %s972 = ssub.s32 256, 256
      %973 = vsyncadd [#allocation4], %s972
      %s974 = sshll.u32 [#allocation7], 4
      %s975 = int_to_ptr.vmem [resolvable:$true] %s974
      %980 = dma.vmem_to_hbm [thread:$0]  %s975, 256, %s6, [#allocation4], 128, 128, 8
    $region37: #{tpu_custom_call.1} parent=1 // pred_fallthru
      _
    // Predicated region
    $region38: #{tpu_custom_call.1} parent=1 // pred_check
      _
    $region39: #{tpu_custom_call.1} parent=1 // pred_check_branch
      %982 = sbr.rel (0) target = $region41
    $region40: #{tpu_custom_call.1} parent=1 // pred_region
      %983 = dma.done [#allocation4], 256
    $region41: #{tpu_custom_call.1} parent=1 // pred_fallthru
      _
    %984 = vsyncpa [#allocation3], 1
    %985 = vsyncpa [#allocation6], 1
    %986 = vsyncpa [#allocation4], 1

</llo_original>
